<compile_context>
chip_gen: v6e
topology: v6e:2x2x1
jax: 0.10.0
libtpu: 0.0.40
codegen_flags: <defaults>
</compile_context>

<pallas_src>
import functools

import jax
import jax.numpy as jnp
from jax.experimental import pallas as pl
from jax.experimental.pallas import tpu as pltpu

LANES = 128
DEFAULT_TILE_ROWS = 1024  # sweep 512/1024/2048; 1024 keeps the working set ~2 MiB


def _cdiv(a, b):
    return (a + b - 1) // b


def _round_up(a, b):
    return _cdiv(a, b) * b


# ----------------------------------------------------------------------------
# Kernels
# ----------------------------------------------------------------------------
def _xtanh_mean_kernel(a_ref, b_ref, out_ref, *, n, tile_rows, steps_per_chunk,
                       masked):
    c = pl.program_id(0)   # parallel chunk axis (megacore split on v7x)
    i = pl.program_id(1)   # reduction axis within the chunk

    @pl.when(i == 0)
    def _():
        out_ref[...] = jnp.zeros_like(out_ref)

    a = a_ref[...].astype(jnp.float32)
    b = b_ref[...].astype(jnp.float32)
    e = a - b + 1e-12
    val = e * jnp.tanh(e)

    if masked:
        # Only needed when the flat array was zero-padded: keep the mean exact
        # by zeroing contributions past the true element count n.
        gb = c * steps_per_chunk + i
        row = jax.lax.broadcasted_iota(jnp.int32, (tile_rows, LANES), 0)
        col = jax.lax.broadcasted_iota(jnp.int32, (tile_rows, LANES), 1)
        flat = (gb * tile_rows + row) * LANES + col
        val = jnp.where(flat < n, val, 0.0)

    # The (8, 128) output block stays resident across the reduction axis:
    # VPU adds only in steady state; the tiny cross-lane reduce happens once,
    # in the wrapper, on the (n_chunks*8, 128) partial-sum slab.
    out_ref[...] += val.reshape(tile_rows // 8, 8, LANES).sum(axis=0)


def _xtanh_map_kernel(a_ref, b_ref, o_ref):
    a = a_ref[...].astype(jnp.float32)
    b = b_ref[...].astype(jnp.float32)
    e = a - b + 1e-12
    o_ref[...] = (e * jnp.tanh(e)).astype(o_ref.dtype)


# ----------------------------------------------------------------------------
# Wrapper
# ----------------------------------------------------------------------------
def xtanh_loss(y_t, y_prime_t, reduction="mean"):
    """Pallas-TPU implementation of XTanhLoss.forward."""
    assert y_t.shape == y_prime_t.shape
    orig_shape = y_t.shape
    n = y_t.size

    a = y_t.reshape(-1)          # keep original dtype; cast happens in-kernel
    b = y_prime_t.reshape(-1)

    rows = _cdiv(n, LANES)
    tile_rows = min(DEFAULT_TILE_ROWS, _round_up(max(rows, 1), 8))
    rows_padded = _round_up(rows, tile_rows)
    n_padded = rows_padded * LANES
    needs_pad = n_padded != n

    if needs_pad:
        # Ragged tail only: one pad (zeros); exactness restored by the
        # in-kernel mask for 'mean' and by slicing back for 'none'.
        a = jnp.pad(a, (0, n_padded - n))
        b = jnp.pad(b, (0, n_padded - n))

    a2 = a.reshape(rows_padded, LANES)
    b2 = b.reshape(rows_padded, LANES)
    total_steps = rows_padded // tile_rows

    if reduction == "mean":
        # 2-way parallel chunk axis only when it divides evenly (no extra pad);
        # lets v7x split the reduction across its two TensorCores.
        n_chunks = 2 if (total_steps >= 2 and total_steps % 2 == 0) else 1
        steps_per_chunk = total_steps // n_chunks

        kernel = functools.partial(
            _xtanh_mean_kernel, n=n, tile_rows=tile_rows,
            steps_per_chunk=steps_per_chunk, masked=needs_pad)

        in_spec = pl.BlockSpec(
            (tile_rows, LANES), lambda c, i: (c * steps_per_chunk + i, 0))
        out_spec = pl.BlockSpec((8, LANES), lambda c, i: (c, 0))

        partials = pl.pallas_call(
            kernel,
            out_shape=jax.ShapeDtypeStruct((n_chunks * 8, LANES), jnp.float32),
            grid_spec=pltpu.PrefetchScalarGridSpec(
                num_scalar_prefetch=0,
                grid=(n_chunks, steps_per_chunk),
                in_specs=[in_spec, in_spec],
                out_specs=out_spec),
            compiler_params=pltpu.CompilerParams(
                dimension_semantics=("parallel", "arbitrary")),
            cost_estimate=pl.CostEstimate(
                flops=6 * n,
                transcendentals=n,
                bytes_accessed=2 * n * y_t.dtype.itemsize
                + n_chunks * 8 * LANES * 4),
        )(a2, b2)
        return jnp.sum(partials) * (1.0 / n)

    # reduction != 'mean' -> elementwise ey_t * tanh(ey_t)
    tile_spec = pl.BlockSpec((tile_rows, LANES), lambda i: (i, 0))
    out2 = pl.pallas_call(
        _xtanh_map_kernel,
        out_shape=jax.ShapeDtypeStruct((rows_padded, LANES), y_t.dtype),
        grid=(total_steps,),
        in_specs=[tile_spec, tile_spec],
        out_specs=tile_spec,
        compiler_params=pltpu.CompilerParams(
            dimension_semantics=("parallel",)),
        cost_estimate=pl.CostEstimate(
            flops=6 * n,
            transcendentals=n,
            bytes_accessed=3 * n * y_t.dtype.itemsize),
    )(a2, b2)
    flat = out2.reshape(-1)
    if needs_pad:
        flat = flat[:n]
    return flat.reshape(orig_shape)


# ----------------------------------------------------------------------------
# Reference (pure JAX) for a correctness check
# ----------------------------------------------------------------------------
def _ref_xtanh(y_t, y_prime_t, reduction="mean"):
    e = y_t.astype(jnp.float32) - y_prime_t.astype(jnp.float32) + 1e-12
    v = e * jnp.tanh(e)
    if reduction == "mean":
        return jnp.mean(v)
    return v.astype(y_t.dtype)


if __name__ == "__main__":
    key = jax.random.PRNGKey(0)

    def _check(shape, ks):
        k1, k2 = jax.random.split(ks)
        y_t = jax.random.normal(k1, shape, dtype=jnp.float32)
        y_prime_t = jax.random.normal(k2, shape, dtype=jnp.float32)

        # 'mean' reduction (default).
        loss = xtanh_loss(y_t, y_prime_t)
        jax.block_until_ready(loss)
        ref = _ref_xtanh(y_t, y_prime_t)
        assert jnp.allclose(loss, ref, rtol=1e-4, atol=1e-6), (shape, loss, ref)

        # 'none' (elementwise) reduction.
        elem = xtanh_loss(y_t, y_prime_t, reduction="none")
        jax.block_until_ready(elem)
        ref_e = _ref_xtanh(y_t, y_prime_t, reduction="none")
        assert jnp.allclose(elem, ref_e, rtol=1e-4, atol=1e-6), shape

    k_main, k_ragged, k_big = jax.random.split(key, 3)

    # Small NCHW-shaped example (the module has no learned parameters).
    _check((2, 4, 16, 16), k_main)
    # Ragged size: exercises the pad + in-kernel mask path.
    _check((3, 5, 7), k_ragged)
    # Larger even-step size: exercises the 2-chunk ("parallel") reduction path.
    _check((2, 4, 256, 256), k_big)

    print("KERNEL_OK")
</pallas_src>

<mosaic_0001>
module attributes {stable_mosaic.version = 11 : i64} {
  func.func @_xtanh_mean_kernel(%arg0: i32, %arg1: i32, %arg2: memref<16x128xf32, #tpu.memory_space<vmem>>, %arg3: memref<16x128xf32, #tpu.memory_space<vmem>>, %arg4: memref<8x128xf32, #tpu.memory_space<vmem>>) attributes {dimension_semantics = [#tpu.dimension_semantics<parallel>, #tpu.dimension_semantics<arbitrary>], iteration_bounds = array<i64: 1, 1>, scalar_prefetch = 0 : i64, scratch_operands = 0 : i64, tpu.core_type = #tpu.core_type<tc>, window_params = [{transform_indices = @transform_0, window_bounds = array<i64: 16, 128>}, {transform_indices = @transform_1, window_bounds = array<i64: 16, 128>}, {transform_indices = @transform_2, window_bounds = array<i64: 8, 128>}]} {
    %c0_i32 = arith.constant 0 : i32
    %0 = arith.cmpi eq, %arg1, %c0_i32 : i32
    %1 = arith.extui %0 : i1 to i32
    %c0_i32_0 = arith.constant 0 : i32
    %2 = arith.cmpi ne, %1, %c0_i32_0 : i32
    scf.if %2 {
      %cst_9 = arith.constant 0.000000e+00 : f32
      %15 = vector.broadcast %cst_9 : f32 to vector<8x128xf32>
      %c0_10 = arith.constant 0 : index
      %c0_11 = arith.constant 0 : index
      %16 = vector.load %arg4[%c0_10, %c0_11] : memref<8x128xf32, #tpu.memory_space<vmem>>, vector<8x128xf32>
      tpu.vector_store %arg4[%c0_10, %c0_11], %15 {strides = array<i32>} : memref<8x128xf32, #tpu.memory_space<vmem>>, vector<8x128xf32>,
    } else {
    }
    %c0 = arith.constant 0 : index
    %c0_1 = arith.constant 0 : index
    %3 = vector.load %arg2[%c0, %c0_1] : memref<16x128xf32, #tpu.memory_space<vmem>>, vector<16x128xf32>
    %c0_2 = arith.constant 0 : index
    %c0_3 = arith.constant 0 : index
    %4 = vector.load %arg3[%c0_2, %c0_3] : memref<16x128xf32, #tpu.memory_space<vmem>>, vector<16x128xf32>
    %5 = arith.subf %3, %4 : vector<16x128xf32>
    %cst = arith.constant 9.99999996E-13 : f32
    %6 = vector.broadcast %cst : f32 to vector<16x128xf32>
    %7 = arith.addf %5, %6 : vector<16x128xf32>
    %8 = math.tanh %7 : vector<16x128xf32>
    %9 = arith.mulf %7, %8 : vector<16x128xf32>
    %c0_4 = arith.constant 0 : index
    %c0_5 = arith.constant 0 : index
    %10 = vector.load %arg4[%c0_4, %c0_5] : memref<8x128xf32, #tpu.memory_space<vmem>>, vector<8x128xf32>
    %11 = vector.shape_cast %9 : vector<16x128xf32> to vector<2x8x128xf32>
    %cst_6 = arith.constant dense<0.000000e+00> : vector<8x128xf32>
    %12 = vector.multi_reduction <add>, %11, %cst_6 [0] : vector<2x8x128xf32> to vector<8x128xf32>
    %13 = arith.addf %10, %12 : vector<8x128xf32>
    %c0_7 = arith.constant 0 : index
    %c0_8 = arith.constant 0 : index
    %14 = vector.load %arg4[%c0_7, %c0_8] : memref<8x128xf32, #tpu.memory_space<vmem>>, vector<8x128xf32>
    tpu.vector_store %arg4[%c0_7, %c0_8], %13 {strides = array<i32>} : memref<8x128xf32, #tpu.memory_space<vmem>>, vector<8x128xf32>,
    return
  }
  func.func @transform_0(%arg0: i32, %arg1: i32) -> (i32, i32) {
    %c1_i32 = arith.constant 1 : i32
    %0 = arith.muli %arg0, %c1_i32 : i32
    %1 = arith.addi %0, %arg1 : i32
    %c0_i32 = arith.constant 0 : i32
    %c0_i32_0 = arith.constant 0 : i32
    return %1, %c0_i32 : i32, i32
  }
  func.func @transform_1(%arg0: i32, %arg1: i32) -> (i32, i32) {
    %c1_i32 = arith.constant 1 : i32
    %0 = arith.muli %arg0, %c1_i32 : i32
    %1 = arith.addi %0, %arg1 : i32
    %c0_i32 = arith.constant 0 : i32
    %c0_i32_0 = arith.constant 0 : i32
    return %1, %c0_i32 : i32, i32
  }
  func.func @transform_2(%arg0: i32, %arg1: i32) -> (i32, i32) {
    %c0_i32 = arith.constant 0 : i32
    %c0_i32_0 = arith.constant 0 : i32
    return %arg0, %c0_i32 : i32, i32
  }
}

</mosaic_0001>

<llo_original>
// kernel: tpu_custom_call.1
$region0: #{tpu_custom_call.1}
  #allocation0 [shape = 'u32[]', space=smem, size = 0x4, offset = 0x4, fixed_abs, tag = 'smem constant byte address 0x4 - core index']
  #allocation1 [shape = 'u32[144,128]{1,0:T(1,128)}', space=vmem, size = 0x12000, scoped, tag = 'internal scratch']
  %s0 = inlined_call_operand.hbm [shape: f32[16,128], index: 0, kind: input, shape index: {}]
  %s1 = inlined_call_operand.hbm [shape: f32[16,128], index: 1, kind: input, shape index: {}]
  %s2 = inlined_call_operand.hbm [shape: f32[8,128], index: 2, kind: output, shape index: {}]
  %s3 = sld [smem:[#allocation0]]
  $region30: #{tpu_custom_call.1} parent=0
    _
  %s5 = ssub.s32 1, %s3
  %s6 = scalar_select 0, %s5, %s3
  $region1: #{tpu_custom_call.1} parent=0
    #allocation2 [shape = 'u8[8192]{0}', space=vmem, size = 0x2000, scoped, tag = 'input window, operand 0, single buffered']
    #allocation3 [shape = 's32[1]{0}', space=sflag, size = 0x4, scoped, tag = 'scoped memory for tpu_custom_call.1']
    #allocation4 [shape = 's32[1]{0}', space=sflag, size = 0x4, scoped, tag = 'scoped memory for tpu_custom_call.1']
    #allocation5 [shape = 'u8[8192]{0}', space=vmem, size = 0x2000, scoped, tag = 'input window, operand 1, single buffered']
    #allocation6 [shape = 's32[1]{0}', space=sflag, size = 0x4, scoped, tag = 'scoped memory for tpu_custom_call.1']
    #allocation7 [shape = 'u8[4096]{0}', space=vmem, size = 0x1000, scoped, tag = 'output window, operand 0, single buffered']
    %7 = vsyncpa [#allocation3], 0
    %8 = vsyncpa [#allocation6], 0
    %9 = vsyncpa [#allocation4], 0
    // Predicated region
    $region2: #{tpu_custom_call.1} parent=1 // pred_check
      _
    $region3: #{tpu_custom_call.1} parent=1 // pred_check_branch
      %11 = sbr.rel (0) target = $region5
    $region4: #{tpu_custom_call.1} parent=1 // pred_region
      %s12 = sadd.s32 0, 0
      %s13 = smul.u32 2, %s12
      %s15 = ssub.s32 256, 256
      %16 = vsyncadd [#allocation3], %s15
      %s17 = smul.addr %s13, 128
      %s18 = scalar_lea.hbm %s0, %s17
      %s19 = sshll.u32 [#allocation2], 4
      %s20 = int_to_ptr.vmem [resolvable:$true] %s19
      %25 = dma.hbm_to_vmem [thread:$0]  %s18, 256, %s20, [#allocation3], 128, 128, 8
    $region5: #{tpu_custom_call.1} parent=1 // pred_fallthru
      _
    // Predicated region
    $region6: #{tpu_custom_call.1} parent=1 // pred_check
      _
    $region7: #{tpu_custom_call.1} parent=1 // pred_check_branch
      %27 = sbr.rel (0) target = $region9
    $region8: #{tpu_custom_call.1} parent=1 // pred_region
      %s28 = sadd.s32 0, 0
      %s29 = smul.u32 2, %s28
      %s31 = ssub.s32 256, 256
      %32 = vsyncadd [#allocation6], %s31
      %s33 = smul.addr %s29, 128
      %s34 = scalar_lea.hbm %s1, %s33
      %s35 = sshll.u32 [#allocation5], 4
      %s36 = int_to_ptr.vmem [resolvable:$true] %s35
      %41 = dma.hbm_to_vmem [thread:$0]  %s34, 256, %s36, [#allocation6], 128, 128, 8
    $region9: #{tpu_custom_call.1} parent=1 // pred_fallthru
      _
    // Predicated region
    $region10: #{tpu_custom_call.1} parent=1 // pred_check
      _
    $region11: #{tpu_custom_call.1} parent=1 // pred_check_branch
      %43 = sbr.rel (0) target = $region13
    $region12: #{tpu_custom_call.1} parent=1 // pred_region
      %44 = dma.done [#allocation3], 256
    $region13: #{tpu_custom_call.1} parent=1 // pred_fallthru
      _
    // Predicated region
    $region14: #{tpu_custom_call.1} parent=1 // pred_check
      _
    $region15: #{tpu_custom_call.1} parent=1 // pred_check_branch
      %46 = sbr.rel (0) target = $region17
    $region16: #{tpu_custom_call.1} parent=1 // pred_region
      %47 = dma.done [#allocation6], 256
    $region17: #{tpu_custom_call.1} parent=1 // pred_fallthru
      _
    %s48 = sadd.s32 0, 0
    %s49 = smul.u32 2, %s48
    %s50 = sadd.s32 0, 0
    %s51 = smul.u32 2, %s50
    %p52 = scmp.eq.s32.totalorder 0, 0
    // Predicated region
    $region18: #{tpu_custom_call.1} parent=1 // pred_check
      %p53 = pneg %p52
    $region19: #{tpu_custom_call.1} parent=1 // pred_check_branch
      %55 = sbr.rel (%p53) target = $region21
    $region20: #{tpu_custom_call.1} parent=1 // pred_region
      %56 = vst [vmem:[#allocation7] sm:$0xff] 0.0
    $region21: #{tpu_custom_call.1} parent=1 // pred_fallthru
      _
    %v57 = vld [vmem:[#allocation2] sm:$0xff]
    %v58 = vld [vmem:[#allocation2 + $0x8] sm:$0xff]
    %v59 = vld [vmem:[#allocation5] sm:$0xff]
    %v60 = vld [vmem:[#allocation5 + $0x8] sm:$0xff]
    %v61 = vsub.f32 %v57, %v59
    %v62 = vsub.f32 %v58, %v60
    %v63 = vadd.f32 %v61, 1e-12
    %v64 = vadd.f32 %v62, 1e-12
    %v65 = vtanh.pop %v63
    %v66 = vtanh.pop %v64
    %v67 = vmul.f32 %v63, %v65
    %v68 = vmul.f32 %v64, %v66
    %v69 = vld [vmem:[#allocation7] sm:$0xff]
    %v70 = vadd.f32 %v67, %v68
    %v71 = vadd.f32 %v69, %v70
    %72 = vst [vmem:[#allocation7] sm:$0xff] %v71
    // Predicated region
    $region22: #{tpu_custom_call.1} parent=1 // pred_check
      _
    $region23: #{tpu_custom_call.1} parent=1 // pred_check_branch
      %74 = sbr.rel (0) target = $region25
    $region24: #{tpu_custom_call.1} parent=1 // pred_region
      %s76 = ssub.s32 128, 128
      %77 = vsyncadd [#allocation4], %s76
      %s79 = sshll.u32 [#allocation7], 4
      %s80 = int_to_ptr.vmem [resolvable:$true] %s79
      %82 = dma.vmem_to_hbm [thread:$0]  %s80, 128, %s2, [#allocation4]
    $region25: #{tpu_custom_call.1} parent=1 // pred_fallthru
      _
    // Predicated region
    $region26: #{tpu_custom_call.1} parent=1 // pred_check
      _
    $region27: #{tpu_custom_call.1} parent=1 // pred_check_branch
      %84 = sbr.rel (0) target = $region29
    $region28: #{tpu_custom_call.1} parent=1 // pred_region
      %85 = dma.done [#allocation4], 128
    $region29: #{tpu_custom_call.1} parent=1 // pred_fallthru
      _
    %86 = vsyncpa [#allocation3], 1
    %87 = vsyncpa [#allocation6], 1
    %88 = vsyncpa [#allocation4], 1

</llo_original>
